<compile_context>
chip_gen: v7x
topology: tpu7x:2x2x1
jax: 0.10.0
libtpu: 0.0.40
codegen_flags: <defaults>
</compile_context>

<pallas_src>
import functools

import jax
import jax.numpy as jnp
from jax.experimental import pallas as pl
from jax.experimental.pallas import tpu as pltpu

_LANES = 128
_SUBLANES = 8
_DEFAULT_BLOCK_BYTES = 2 * 1024 * 1024  # ~2 MiB per input per buffer (v7x target)
_VMEM_LIMIT_BYTES = 32 * 1024 * 1024    # <= physical VMEM on v5e/v6e/v7x


def _d_loss_partial_kernel(n_ref, dgz_ref, dx_ref, out_ref, *, block_rows):
    """Accumulates sum(DGz - Dx) for this core's stream into an (8,128) slab."""
    c = pl.program_id(0)          # core-split axis ("parallel")
    i = pl.program_id(1)          # streaming axis ("arbitrary")

    @pl.when(i == 0)
    def _init():
        out_ref[...] = jnp.zeros_like(out_ref)

    # Native-dtype loads, in-register upcast, fused subtract (pure VPU filler
    # under the HBM DMA).
    diff = dgz_ref[...].astype(jnp.float32) - dx_ref[...].astype(jnp.float32)

    n = n_ref[0]
    block_elems = block_rows * _LANES
    # Logical flat-element offset of this block (int32 is fine for < 2^31
    # scores; WGAN batches are nowhere near that).
    start = (c * pl.num_programs(1) + i) * block_elems
    is_full = start + block_elems <= n

    @pl.when(is_full)
    def _full_block():
        # Fold (block_rows,128) -> (8,128): vreg-wise adds only, no XLU reduce,
        # no scalar-carried dependency chain, no per-step (1,1) masked store.
        out_ref[...] += diff.reshape(-1, _SUBLANES, _LANES).sum(axis=0)

    @pl.when(jnp.logical_not(is_full))
    def _ragged_block():
        # Last (or phantom) block: mask elements whose logical index >= n.
        # Covers grid overrun rows (unspecified data), the <128-element tail
        # pad and clamped phantom blocks on the second core.
        row = jax.lax.broadcasted_iota(jnp.int32, (block_rows, _LANES), 0)
        col = jax.lax.broadcasted_iota(jnp.int32, (block_rows, _LANES), 1)
        idx = start + row * _LANES + col
        masked = jnp.where(idx < n, diff, 0.0)
        out_ref[...] += masked.reshape(-1, _SUBLANES, _LANES).sum(axis=0)


def d_loss(DGz, Dx, gradient_penalty, lambd=10.0, *,
           block_bytes=_DEFAULT_BLOCK_BYTES):
    """WGAN-GP discriminator loss: mean(DGz) - mean(Dx) + lambd * gp (f32)."""
    n = int(DGz.size)
    assert int(Dx.size) == n, "DGz and Dx must have the same number of scores"
    assert n > 0

    # ---- Pack scores into lane-dense (rows, 128) slabs, no full-array pad. ----
    flat_g = jnp.ravel(DGz)   # free reshapes for contiguous (B,1)/(B,) scores
    flat_x = jnp.ravel(Dx)
    rows = -(-n // _LANES)
    padded_n = rows * _LANES
    if padded_n != n:
        # Only the ragged tail (< 128 elements) is padded so the reshape is
        # legal; the pad value is irrelevant (kernel masks by the true n).
        flat_g = jnp.pad(flat_g, (0, padded_n - n))
        flat_x = jnp.pad(flat_x, (0, padded_n - n))
    g2 = flat_g.reshape(rows, _LANES)
    x2 = flat_x.reshape(rows, _LANES)

    # ---- dtype-aware block sizing (~block_bytes per input per buffer). ----
    isz_g = jnp.dtype(DGz.dtype).itemsize
    isz_x = jnp.dtype(Dx.dtype).itemsize
    itemsize_max = max(isz_g, isz_x)
    packing = max(_SUBLANES, 32 // min(isz_g, isz_x))   # 8 f32, 16 bf16, 32 i8
    max_rows = max(packing,
                   (block_bytes // (_LANES * itemsize_max)) // packing * packing)
    rows_rounded = -(-rows // packing) * packing
    block_rows = min(max_rows, rows_rounded)             # don't over-allocate VMEM
    nb_total = -(-rows // block_rows)

    # ---- Two-way core split (v7x megacore); harmless serial loop on 1-TC chips.
    num_splits = 2 if nb_total >= 2 else 1
    nb_per_core = -(-nb_total // num_splits)

    def in_map(c, i):
        blk = c * nb_per_core + i
        # Clamp phantom blocks (odd nb_total) so the DMA never starts past the
        # array; their contribution is fully masked in-kernel anyway.
        return (jnp.minimum(blk, nb_total - 1), 0)

    kernel = functools.partial(_d_loss_partial_kernel, block_rows=block_rows)

    partials = pl.pallas_call(
        kernel,
        out_shape=jax.ShapeDtypeStruct((num_splits * _SUBLANES, _LANES),
                                       jnp.float32),
        grid=(num_splits, nb_per_core),
        in_specs=[
            pl.BlockSpec(memory_space=pltpu.SMEM),                  # n (scalar)
            pl.BlockSpec((block_rows, _LANES), in_map),             # DGz slab
            pl.BlockSpec((block_rows, _LANES), in_map),             # Dx slab
        ],
        # Per-core resident (8,128) accumulator block, revisited across i.
        out_specs=pl.BlockSpec((_SUBLANES, _LANES), lambda c, i: (c, 0)),
        compiler_params=pltpu.CompilerParams(
            dimension_semantics=("parallel", "arbitrary"),
            vmem_limit_bytes=_VMEM_LIMIT_BYTES),
    )(jnp.array([n], dtype=jnp.int32), g2, x2)

    # Tiny wrapper-side epilogue (one fused XLA op over <= 16x128 f32):
    # combine per-core partials, scale by 1/N, add lambd * gp.
    gp = jnp.asarray(gradient_penalty, dtype=jnp.float32).reshape(())
    return jnp.sum(partials) * jnp.float32(1.0 / n) + jnp.float32(lambd) * gp


if __name__ == "__main__":
    key = jax.random.PRNGKey(0)
    k1, k2, k3 = jax.random.split(key, 3)
    lambd = 10.0

    # Case 1: canonical WGAN-GP shapes — one discriminator score per sample.
    DGz = jax.random.normal(k1, (8, 1), dtype=jnp.float32)
    Dx = jax.random.normal(k2, (8, 1), dtype=jnp.float32)
    gp = jax.random.uniform(k3, (), dtype=jnp.float32)
    loss = jax.block_until_ready(d_loss(DGz, Dx, gp, lambd))
    ref = jnp.mean(DGz) - jnp.mean(Dx) + lambd * gp
    assert jnp.allclose(loss, ref, rtol=1e-5, atol=1e-5), (loss, ref)

    # Case 2: bf16 scores (native-dtype loads + in-kernel upcast); n % 128 == 0
    # so the wrapper-side tail pad is skipped entirely.
    DGz_b = jax.random.normal(k1, (256, 1), dtype=jnp.bfloat16)
    Dx_b = jax.random.normal(k2, (256, 1), dtype=jnp.bfloat16)
    loss_b = jax.block_until_ready(d_loss(DGz_b, Dx_b, gp, lambd))
    ref_b = (jnp.mean(DGz_b.astype(jnp.float32))
             - jnp.mean(Dx_b.astype(jnp.float32)) + lambd * gp)
    assert jnp.allclose(loss_b, ref_b, rtol=1e-5, atol=1e-5), (loss_b, ref_b)

    # Case 3: ragged n with a tiny block size to exercise the multi-block grid,
    # the two-way core split, the clamped phantom block and the iota tail mask
    # while keeping the data small.
    DGz_r = jax.random.normal(k1, (5000,), dtype=jnp.float32)
    Dx_r = jax.random.normal(k2, (5000,), dtype=jnp.float32)
    loss_r = jax.block_until_ready(d_loss(DGz_r, Dx_r, gp, lambd,
                                          block_bytes=8192))
    ref_r = jnp.mean(DGz_r) - jnp.mean(Dx_r) + lambd * gp
    assert jnp.allclose(loss_r, ref_r, rtol=1e-5, atol=1e-5), (loss_r, ref_r)

    print("KERNEL_OK")
</pallas_src>

<mosaic_0001>
module attributes {stable_mosaic.version = 11 : i64} {
  func.func @_d_loss_partial_kernel(%arg0: i32, %arg1: i32, %arg2: memref<1xi32, #tpu.memory_space<smem>>, %arg3: memref<8x128xf32, #tpu.memory_space<vmem>>, %arg4: memref<8x128xf32, #tpu.memory_space<vmem>>, %arg5: memref<8x128xf32, #tpu.memory_space<vmem>>) attributes {dimension_semantics = [#tpu.dimension_semantics<parallel>, #tpu.dimension_semantics<arbitrary>], iteration_bounds = array<i64: 1, 1>, scalar_prefetch = 0 : i64, scratch_operands = 0 : i64, tpu.core_type = #tpu.core_type<tc>, window_params = [{transform_indices = @transform_0, window_bounds = array<i64: 1>}, {transform_indices = @transform_1, window_bounds = array<i64: 8, 128>}, {transform_indices = @transform_2, window_bounds = array<i64: 8, 128>}, {transform_indices = @transform_3, window_bounds = array<i64: 8, 128>}]} {
    %c0_i32 = arith.constant 0 : i32
    %0 = arith.cmpi eq, %arg1, %c0_i32 : i32
    %1 = arith.extui %0 : i1 to i32
    %c0_i32_0 = arith.constant 0 : i32
    %2 = arith.cmpi ne, %1, %c0_i32_0 : i32
    scf.if %2 {
      %cst = arith.constant 0.000000e+00 : f32
      %17 = vector.broadcast %cst : f32 to vector<8x128xf32>
      %c0_8 = arith.constant 0 : index
      %c0_9 = arith.constant 0 : index
      %18 = vector.load %arg5[%c0_8, %c0_9] : memref<8x128xf32, #tpu.memory_space<vmem>>, vector<8x128xf32>
      tpu.vector_store %arg5[%c0_8, %c0_9], %17 {strides = array<i32>} : memref<8x128xf32, #tpu.memory_space<vmem>>, vector<8x128xf32>,
    } else {
    }
    %c0 = arith.constant 0 : index
    %c0_1 = arith.constant 0 : index
    %3 = vector.load %arg3[%c0, %c0_1] : memref<8x128xf32, #tpu.memory_space<vmem>>, vector<8x128xf32>
    %c0_2 = arith.constant 0 : index
    %c0_3 = arith.constant 0 : index
    %4 = vector.load %arg4[%c0_2, %c0_3] : memref<8x128xf32, #tpu.memory_space<vmem>>, vector<8x128xf32>
    %5 = arith.subf %3, %4 : vector<8x128xf32>
    %c0_4 = arith.constant 0 : index
    %6 = memref.load %arg2[%c0_4] : memref<1xi32, #tpu.memory_space<smem>>
    %c1_i32 = arith.constant 1 : i32
    %7 = arith.muli %arg0, %c1_i32 : i32
    %8 = arith.addi %7, %arg1 : i32
    %c1024_i32 = arith.constant 1024 : i32
    %9 = arith.muli %8, %c1024_i32 : i32
    %c1024_i32_5 = arith.constant 1024 : i32
    %10 = arith.addi %9, %c1024_i32_5 : i32
    %11 = arith.cmpi sle, %10, %6 : i32
    %12 = arith.extui %11 : i1 to i32
    %c0_i32_6 = arith.constant 0 : i32
    %13 = arith.cmpi ne, %12, %c0_i32_6 : i32
    scf.if %13 {
      %c0_8 = arith.constant 0 : index
      %c0_9 = arith.constant 0 : index
      %17 = vector.load %arg5[%c0_8, %c0_9] : memref<8x128xf32, #tpu.memory_space<vmem>>, vector<8x128xf32>
      %18 = vector.shape_cast %5 : vector<8x128xf32> to vector<1x8x128xf32>
      %cst = arith.constant dense<0.000000e+00> : vector<8x128xf32>
      %19 = vector.multi_reduction <add>, %18, %cst [0] : vector<1x8x128xf32> to vector<8x128xf32>
      %20 = arith.addf %17, %19 : vector<8x128xf32>
      %c0_10 = arith.constant 0 : index
      %c0_11 = arith.constant 0 : index
      %21 = vector.load %arg5[%c0_10, %c0_11] : memref<8x128xf32, #tpu.memory_space<vmem>>, vector<8x128xf32>
      tpu.vector_store %arg5[%c0_10, %c0_11], %20 {strides = array<i32>} : memref<8x128xf32, #tpu.memory_space<vmem>>, vector<8x128xf32>,
    } else {
    }
    %true = arith.constant true
    %14 = arith.xori %11, %true : i1
    %15 = arith.extui %14 : i1 to i32
    %c0_i32_7 = arith.constant 0 : i32
    %16 = arith.cmpi ne, %15, %c0_i32_7 : i32
    scf.if %16 {
      %17 = tpu.iota {dimensions = array<i32: 0>} : vector<8x128xi32>
      %18 = tpu.iota {dimensions = array<i32: 1>} : vector<8x128xi32>
      %c128_i32 = arith.constant 128 : i32
      %19 = vector.broadcast %c128_i32 : i32 to vector<8x128xi32>
      %20 = arith.muli %17, %19 : vector<8x128xi32>
      %21 = vector.broadcast %9 : i32 to vector<8x128xi32>
      %22 = arith.addi %21, %20 : vector<8x128xi32>
      %23 = arith.addi %22, %18 : vector<8x128xi32>
      %24 = vector.broadcast %6 : i32 to vector<8x128xi32>
      %25 = arith.cmpi slt, %23, %24 : vector<8x128xi32>
      %cst = arith.constant 0.000000e+00 : f32
      %26 = vector.broadcast %cst : f32 to vector<8x128xf32>
      %27 = arith.select %25, %5, %26 : vector<8x128xi1>, vector<8x128xf32>
      %c0_8 = arith.constant 0 : index
      %c0_9 = arith.constant 0 : index
      %28 = vector.load %arg5[%c0_8, %c0_9] : memref<8x128xf32, #tpu.memory_space<vmem>>, vector<8x128xf32>
      %29 = vector.shape_cast %27 : vector<8x128xf32> to vector<1x8x128xf32>
      %cst_10 = arith.constant dense<0.000000e+00> : vector<8x128xf32>
      %30 = vector.multi_reduction <add>, %29, %cst_10 [0] : vector<1x8x128xf32> to vector<8x128xf32>
      %31 = arith.addf %28, %30 : vector<8x128xf32>
      %c0_11 = arith.constant 0 : index
      %c0_12 = arith.constant 0 : index
      %32 = vector.load %arg5[%c0_11, %c0_12] : memref<8x128xf32, #tpu.memory_space<vmem>>, vector<8x128xf32>
      tpu.vector_store %arg5[%c0_11, %c0_12], %31 {strides = array<i32>} : memref<8x128xf32, #tpu.memory_space<vmem>>, vector<8x128xf32>,
    } else {
    }
    return
  }
  func.func @transform_0(%arg0: i32, %arg1: i32) -> i32 {
    %c0_i32 = arith.constant 0 : i32
    %c0_i32_0 = arith.constant 0 : i32
    return %c0_i32 : i32
  }
  func.func @transform_1(%arg0: i32, %arg1: i32) -> (i32, i32) {
    %c1_i32 = arith.constant 1 : i32
    %0 = arith.muli %arg0, %c1_i32 : i32
    %1 = arith.addi %0, %arg1 : i32
    %c0_i32 = arith.constant 0 : i32
    %2 = arith.minsi %1, %c0_i32 : i32
    %c0_i32_0 = arith.constant 0 : i32
    %c0_i32_1 = arith.constant 0 : i32
    return %2, %c0_i32_0 : i32, i32
  }
  func.func @transform_2(%arg0: i32, %arg1: i32) -> (i32, i32) {
    %c1_i32 = arith.constant 1 : i32
    %0 = arith.muli %arg0, %c1_i32 : i32
    %1 = arith.addi %0, %arg1 : i32
    %c0_i32 = arith.constant 0 : i32
    %2 = arith.minsi %1, %c0_i32 : i32
    %c0_i32_0 = arith.constant 0 : i32
    %c0_i32_1 = arith.constant 0 : i32
    return %2, %c0_i32_0 : i32, i32
  }
  func.func @transform_3(%arg0: i32, %arg1: i32) -> (i32, i32) {
    %c0_i32 = arith.constant 0 : i32
    %c0_i32_0 = arith.constant 0 : i32
    return %arg0, %c0_i32 : i32, i32
  }
}

</mosaic_0001>

<llo_original>
// kernel: tpu_custom_call.1
$region0: #{tpu_custom_call.1}
  #allocation0 [shape = 'u32[]', space=smem, size = 0x4, offset = 0x4, fixed_abs, tag = 'smem constant byte address 0x4 - core index']
  #allocation1 [shape = 'u32[144,128]{1,0:T(1,128)}', space=vmem, size = 0x12000, scoped, tag = 'internal scratch']
  #allocation2 [shape = 's32[1]{0:T(128)S(6)}', space=smem, size = 0x200, scoped, tag = 'scoped memory for tpu_custom_call.1']
  %s0 = inlined_call_operand.<no memory space> [shape: s32[1], index: 0, kind: input, shape index: {}]
  %s1 = inlined_call_operand.vmem [shape: f32[1,128], index: 1, kind: input, shape index: {}]
  %s2 = inlined_call_operand.vmem [shape: f32[1,128], index: 2, kind: input, shape index: {}]
  %s3 = inlined_call_operand.hbm [shape: f32[8,128], index: 3, kind: output, shape index: {}]
  %s4 = sld [smem:[#allocation0]]
  $region34: #{tpu_custom_call.1} parent=0
    _
  %s6 = ssub.s32 1, %s4
  %s7 = scalar_select 0, %s6, %s4
  %8 = sst [smem:[#allocation2]] %s0
  $region1: #{tpu_custom_call.1} parent=0
    #allocation3 [shape = 'u8[4096]{0}', space=vmem, size = 0x1000, scoped, tag = 'output window, operand 0, single buffered']
    #allocation4 [shape = 's32[1]{0}', space=sflag, size = 0x4, scoped, tag = 'scoped memory for tpu_custom_call.1']
    %9 = vsyncpa [#allocation4], 0
    // Predicated region
    $region2: #{tpu_custom_call.1} parent=1 // pred_check
      _
    $region3: #{tpu_custom_call.1} parent=1 // pred_check_branch
      %11 = sbr.rel (0) target = $region5
    $region4: #{tpu_custom_call.1} parent=1 // pred_region
      _
    $region5: #{tpu_custom_call.1} parent=1 // pred_fallthru
      _
    // Predicated region
    $region6: #{tpu_custom_call.1} parent=1 // pred_check
      _
    $region7: #{tpu_custom_call.1} parent=1 // pred_check_branch
      %13 = sbr.rel (0) target = $region9
    $region8: #{tpu_custom_call.1} parent=1 // pred_region
      %s14 = sadd.s32 0, 0
      %p15 = scmp.lt.s32.totalorder %s14, 0
      %s16 = scalar_select %p15, %s14, 0
      %s17 = smul.u32 8, %s16
      %s18 = ssub.s32 1, %s17
      %s19 = smul.u32 16, %s18
      %p20 = scmp.lt.s32.totalorder %s17, 0
      %s21 = scalar_select %p20, %s17, 0
      %s22 = scalar_lea.vmem %s1, %s21
      %s23 = sadd.s32 0, 0
      %p24 = scmp.lt.s32.totalorder %s23, 0
      %s25 = scalar_select %p24, %s23, 0
      %s26 = smul.u32 8, %s25
      %s27 = ssub.s32 1, %s26
      %s28 = smul.u32 16, %s27
    $region9: #{tpu_custom_call.1} parent=1 // pred_fallthru
      _
    // Predicated region
    $region10: #{tpu_custom_call.1} parent=1 // pred_check
      _
    $region11: #{tpu_custom_call.1} parent=1 // pred_check_branch
      %30 = sbr.rel (0) target = $region13
    $region12: #{tpu_custom_call.1} parent=1 // pred_region
      %s31 = sadd.s32 0, 0
      %p32 = scmp.lt.s32.totalorder %s31, 0
      %s33 = scalar_select %p32, %s31, 0
      %s34 = smul.u32 8, %s33
      %s35 = ssub.s32 1, %s34
      %s36 = smul.u32 16, %s35
      %p37 = scmp.lt.s32.totalorder %s34, 0
      %s38 = scalar_select %p37, %s34, 0
      %s39 = scalar_lea.vmem %s2, %s38
      %s40 = sadd.s32 0, 0
      %p41 = scmp.lt.s32.totalorder %s40, 0
      %s42 = scalar_select %p41, %s40, 0
      %s43 = smul.u32 8, %s42
      %s44 = ssub.s32 1, %s43
      %s45 = smul.u32 16, %s44
    $region13: #{tpu_custom_call.1} parent=1 // pred_fallthru
      _
    %s46 = sadd.s32 0, 0
    %p47 = scmp.lt.s32.totalorder %s46, 0
    %s48 = scalar_select %p47, %s46, 0
    %s49 = smul.u32 8, %s48
    %s50 = ssub.s32 1, %s49
    %s51 = smul.u32 16, %s50
    %p52 = scmp.lt.s32.totalorder %s49, 0
    %s53 = scalar_select %p52, %s49, 0
    %s54 = scalar_lea.vmem %s1, %s53
    %s55 = sadd.s32 0, 0
    %p56 = scmp.lt.s32.totalorder %s55, 0
    %s57 = scalar_select %p56, %s55, 0
    %s58 = smul.u32 8, %s57
    %s59 = ssub.s32 1, %s58
    %s60 = smul.u32 16, %s59
    %p61 = scmp.lt.s32.totalorder %s58, 0
    %s62 = scalar_select %p61, %s58, 0
    %s63 = scalar_lea.vmem %s2, %s62
    %s64 = sadd.s32 0, 0
    %p65 = scmp.lt.s32.totalorder %s64, 0
    %s66 = scalar_select %p65, %s64, 0
    %s67 = smul.u32 8, %s66
    %s68 = ssub.s32 1, %s67
    %s69 = smul.u32 16, %s68
    %p70 = scmp.lt.s32.totalorder %s67, 0
    %s71 = scalar_select %p70, %s67, 0
    %s72 = scalar_lea.vmem %s1, %s71
    %s73 = sadd.s32 0, 0
    %p74 = scmp.lt.s32.totalorder %s73, 0
    %s75 = scalar_select %p74, %s73, 0
    %s76 = smul.u32 8, %s75
    %s77 = ssub.s32 1, %s76
    %s78 = smul.u32 16, %s77
    %s79 = sadd.s32 0, 0
    %p80 = scmp.lt.s32.totalorder %s79, 0
    %s81 = scalar_select %p80, %s79, 0
    %s82 = smul.u32 8, %s81
    %s83 = ssub.s32 1, %s82
    %s84 = smul.u32 16, %s83
    %p85 = scmp.lt.s32.totalorder %s82, 0
    %s86 = scalar_select %p85, %s82, 0
    %s87 = scalar_lea.vmem %s2, %s86
    %s88 = sadd.s32 0, 0
    %p89 = scmp.lt.s32.totalorder %s88, 0
    %s90 = scalar_select %p89, %s88, 0
    %s91 = smul.u32 8, %s90
    %s92 = ssub.s32 1, %s91
    %s93 = smul.u32 16, %s92
    %p94 = scmp.eq.s32.totalorder 0, 0
    // Predicated region
    $region14: #{tpu_custom_call.1} parent=1 // pred_check
      %p95 = pneg %p94
    $region15: #{tpu_custom_call.1} parent=1 // pred_check_branch
      %97 = sbr.rel (%p95) target = $region17
    $region16: #{tpu_custom_call.1} parent=1 // pred_region
      %98 = vst [vmem:[#allocation3] sm:$0xff] 0.0
    $region17: #{tpu_custom_call.1} parent=1 // pred_fallthru
      _
    %v99 = vld [vmem:[%s72] sm:$0xff]
    %v100 = vld [vmem:[%s87] sm:$0xff]
    %v101 = vsub.f32 %v99, %v100
    %s102 = sld [smem:[#allocation2]]
    %s103 = sadd.s32 0, 0
    %s104 = smul.u32 %s103, 1024
    %s105 = sadd.s32 %s104, 1024
    %p106 = scmp.le.s32.totalorder %s105, %s102
    // Predicated region
    $region18: #{tpu_custom_call.1} parent=1 // pred_check
      %p107 = pneg %p106
    $region19: #{tpu_custom_call.1} parent=1 // pred_check_branch
      %109 = sbr.rel (%p107) target = $region21
    $region20: #{tpu_custom_call.1} parent=1 // pred_region
      %v110 = vld [vmem:[#allocation3] sm:$0xff]
      %v111 = vadd.f32 %v101, 0.0
      %v112 = vadd.f32 %v110, %v111
      %113 = vst [vmem:[#allocation3] sm:$0xff] %v112
    $region21: #{tpu_custom_call.1} parent=1 // pred_fallthru
      _
    %p114 = scmp.gt.s32.totalorder %s105, %s102
    // Predicated region
    $region22: #{tpu_custom_call.1} parent=1 // pred_check
      %p115 = pneg %p114
    $region23: #{tpu_custom_call.1} parent=1 // pred_check_branch
      %117 = sbr.rel (%p115) target = $region25
    $region24: #{tpu_custom_call.1} parent=1 // pred_region
      %v118 = vlaneseq
      %v119 = vshrl.u32 %v118, 7
      %v120 = vlaneseq
      %v121 = vand.u32 %v120, 127
      %v122 = vmul.u32 %v119, 128
      %v123 = vstv %s104
      %v124 = vadd.s32 %v123, %v122
      %v125 = vadd.s32 %v124, %v121
      %v126 = vstv %s102
      %vm127 = vcmp.lt.s32.totalorder %v125, %v126
      %v128 = vsel %vm127, %v101, 0.0
      %v129 = vld [vmem:[#allocation3] sm:$0xff]
      %v130 = vadd.f32 %v128, 0.0
      %v131 = vadd.f32 %v129, %v130
      %132 = vst [vmem:[#allocation3] sm:$0xff] %v131
    $region25: #{tpu_custom_call.1} parent=1 // pred_fallthru
      _
    // Predicated region
    $region26: #{tpu_custom_call.1} parent=1 // pred_check
      _
    $region27: #{tpu_custom_call.1} parent=1 // pred_check_branch
      %134 = sbr.rel (0) target = $region29
    $region28: #{tpu_custom_call.1} parent=1 // pred_region
      %s136 = ssub.s32 128, 128
      %137 = vsyncadd [#allocation4], %s136
      %s139 = sshll.u32 [#allocation3], 4
      %s140 = int_to_ptr.vmem [resolvable:$true] %s139
      %142 = dma.vmem_to_hbm [thread:$0]  %s140, 128, %s3, [#allocation4]
    $region29: #{tpu_custom_call.1} parent=1 // pred_fallthru
      _
    // Predicated region
    $region30: #{tpu_custom_call.1} parent=1 // pred_check
      _
    $region31: #{tpu_custom_call.1} parent=1 // pred_check_branch
      %144 = sbr.rel (0) target = $region33
    $region32: #{tpu_custom_call.1} parent=1 // pred_region
      %145 = dma.done [#allocation4], 128
    $region33: #{tpu_custom_call.1} parent=1 // pred_fallthru
      _
    %146 = vsyncpa [#allocation4], 1

</llo_original>
